<compile_context>
chip_gen: v6e
topology: v6e:2x2x1
jax: 0.10.0
libtpu: 0.0.40
codegen_flags: <defaults>
</compile_context>

<pallas_src>
import jax
import jax.numpy as jnp
from jax.experimental import pallas as pl
from jax.experimental.pallas import tpu as pltpu


def _round_up(x: int, m: int) -> int:
    return ((x + m - 1) // m) * m


def _round_down(x: int, m: int) -> int:
    return (x // m) * m


def _chomp_copy_kernel(x_ref, o_ref):
    # x_ref: (TR, W_in) VMEM tile; o_ref: (TR, W_out) tile with W_out <= W_in.
    # The prefix slice discards any over-read columns (no-op when W_in == W_out).
    o_ref[...] = x_ref[:, : o_ref.shape[-1]]


def _vmem_budgets():
    """Generation-aware scoped-VMEM limit and tile budget (bytes)."""
    try:
        cap = int(pltpu.get_tpu_info().vmem_capacity_bytes)
    except Exception:
        cap = 64 * 1024 * 1024  # conservative (v7x-sized) fallback
    # v7x (64 MiB physical) -> 32 MiB limit / 24 MiB tile budget;
    # v5e/v6e (128 MiB)     -> 64 MiB limit / 48 MiB tile budget.
    vmem_limit = min(cap // 2, 64 * 1024 * 1024)
    tile_budget = (vmem_limit * 3) // 4
    return vmem_limit, tile_budget


def chomp1d(x: jax.Array, chomp_size: int, *, force_pallas: bool = False,
            target_tile_bytes: int = 4 * 1024 * 1024) -> jax.Array:
    """Equivalent of Chomp1d(chomp_size)(x) for x of shape (N, C, L)."""
    n, c, l = x.shape
    l_out = l - chomp_size
    assert l_out > 0, "chomp_size must be smaller than the sequence length"

    rows = n * c
    itemsize = jnp.dtype(x.dtype).itemsize
    total_out_bytes = rows * l_out * itemsize

    # Lane-narrow outputs hit masked partial stores and tiny strided output
    # DMAs; the plain XLA slice is strictly better there.
    if l_out < 128 and not force_pallas:
        return x[:, :, :l_out]

    x2 = x.reshape(rows, l)
    # Sublane pack factor: 8 rows/vreg for 32-bit, 16 for bf16, 32 for int8.
    sub = max(8, 32 // max(itemsize, 1))

    vmem_limit, tile_budget = _vmem_budgets()

    # Generalized read-skip: shrink the input block to the next 128-multiple of
    # l_out whenever that still fits inside L (the kernel's prefix slice drops
    # the <=127-column over-read). Otherwise read the full row (full extent,
    # so the (8,128) rule is waived).
    l_in_block = _round_up(l_out, 128)
    if l_in_block > l:
        l_in_block = l

    bytes_per_row = (l_in_block + l_out) * itemsize
    bytes_per_row_pipelined = 2 * bytes_per_row  # double-buffered in + out

    if sub * bytes_per_row_pipelined <= tile_budget:
        # --------------------- 1-D row-tiled path ---------------------------
        max_tr = max(sub, _round_down(tile_budget // bytes_per_row_pipelined, sub))
        tr = max(sub, _round_down(target_tile_bytes // bytes_per_row, sub))
        tr = min(tr, max_tr)

        # Keep >= 2 balanced grid steps (pipelining + v7x megacore) whenever
        # the copy is big enough to amortize the ~0.35 us per-step overhead.
        if total_out_bytes > 2 * 1024 * 1024 and tr >= rows and rows >= 2 * sub:
            tr = _round_up(pl.cdiv(rows, 2), sub)
        tr = min(tr, rows)

        grid = (pl.cdiv(rows, tr),)
        in_specs = [pl.BlockSpec((tr, l_in_block), lambda i: (i, 0))]
        out_specs = pl.BlockSpec((tr, l_out), lambda i: (i, 0))
        dim_semantics = ("parallel",)
        read_bytes = rows * l_in_block * itemsize
    else:
        # ------------- 2-D (rows x columns) path for very long L ------------
        tr = min(rows, sub)
        tl = _round_down(max(128, target_tile_bytes // (2 * tr * itemsize)), 128)
        # 2 arrays (in + out) x 2 pipeline buffers must fit the budget.
        max_tl = max(128, _round_down(tile_budget // (4 * tr * itemsize), 128))
        tl = max(128, min(tl, max_tl, _round_up(l_out, 128)))

        grid = (pl.cdiv(rows, tr), pl.cdiv(l_out, tl))
        in_specs = [pl.BlockSpec((tr, tl), lambda i, j: (i, j))]
        out_specs = pl.BlockSpec((tr, tl), lambda i, j: (i, j))
        dim_semantics = ("parallel", "parallel")
        read_bytes = rows * l_out * itemsize  # tail beyond l_out is never DMA'd

    bytes_accessed = read_bytes + rows * l_out * itemsize

    out2 = pl.pallas_call(
        _chomp_copy_kernel,
        out_shape=jax.ShapeDtypeStruct((rows, l_out), x.dtype),
        grid_spec=pltpu.PrefetchScalarGridSpec(
            num_scalar_prefetch=0,
            grid=grid,
            in_specs=in_specs,
            out_specs=out_specs,
        ),
        compiler_params=pltpu.CompilerParams(
            dimension_semantics=dim_semantics,
            vmem_limit_bytes=vmem_limit,
        ),
        cost_estimate=pl.CostEstimate(
            flops=0, transcendentals=0, bytes_accessed=bytes_accessed),
    )(x2)

    return out2.reshape(n, c, l_out)


if __name__ == "__main__":
    key = jax.random.PRNGKey(0)
    k_small, k_big = jax.random.split(key)

    # Small TCN-style input: (batch=2, channels=4, seq=16), chomp 3.
    N, C, L = 2, 4, 16
    chomp_size = 3
    x = jax.random.normal(k_small, (N, C, L), dtype=jnp.float32)

    # l_out = 13 is lane-narrow; default dispatch would use the XLA slice, so
    # force the Pallas kernel here to exercise it.
    out = jax.block_until_ready(chomp1d(x, chomp_size, force_pallas=True))
    ref = x[:, :, :-chomp_size]
    assert out.shape == (N, C, L - chomp_size), out.shape
    assert out.dtype == x.dtype
    assert jnp.array_equal(out, ref), "Pallas output mismatch vs reference slice"

    # Lane-dense case (l_out = 512, read-skip active): default Pallas path.
    x_big = jax.random.normal(k_big, (2, 4, 640), dtype=jnp.float32)
    out_big = jax.block_until_ready(chomp1d(x_big, 128))
    ref_big = x_big[:, :, :-128]
    assert out_big.shape == (2, 4, 512), out_big.shape
    assert jnp.array_equal(out_big, ref_big), "Pallas output mismatch (lane-dense case)"

    print("KERNEL_OK")
</pallas_src>

<mosaic_0001>
module attributes {stable_mosaic.version = 11 : i64} {
  func.func @_chomp_copy_kernel(%arg0: i32, %arg1: memref<8x16xf32, #tpu.memory_space<vmem>>, %arg2: memref<8x13xf32, #tpu.memory_space<vmem>>) attributes {dimension_semantics = [#tpu.dimension_semantics<parallel>], iteration_bounds = array<i64: 1>, scalar_prefetch = 0 : i64, scratch_operands = 0 : i64, tpu.core_type = #tpu.core_type<tc>, window_params = [{transform_indices = @transform_0, window_bounds = array<i64: 8, 16>}, {transform_indices = @transform_1, window_bounds = array<i64: 8, 13>}]} {
    %c0 = arith.constant 0 : index
    %c0_0 = arith.constant 0 : index
    %0 = vector.load %arg1[%c0, %c0_0] : memref<8x16xf32, #tpu.memory_space<vmem>>, vector<8x13xf32>
    %c0_1 = arith.constant 0 : index
    %c0_2 = arith.constant 0 : index
    %1 = vector.load %arg2[%c0_1, %c0_2] : memref<8x13xf32, #tpu.memory_space<vmem>>, vector<8x13xf32>
    tpu.vector_store %arg2[%c0_1, %c0_2], %0 {strides = array<i32>} : memref<8x13xf32, #tpu.memory_space<vmem>>, vector<8x13xf32>,
    return
  }
  func.func @transform_0(%arg0: i32) -> (i32, i32) {
    %c0_i32 = arith.constant 0 : i32
    %c0_i32_0 = arith.constant 0 : i32
    return %arg0, %c0_i32 : i32, i32
  }
  func.func @transform_1(%arg0: i32) -> (i32, i32) {
    %c0_i32 = arith.constant 0 : i32
    %c0_i32_0 = arith.constant 0 : i32
    return %arg0, %c0_i32 : i32, i32
  }
}

</mosaic_0001>

<llo_original>
// kernel: tpu_custom_call.1
$region0: #{tpu_custom_call.1}
  #allocation0 [shape = 'u32[]', space=smem, size = 0x4, offset = 0x4, fixed_abs, tag = 'smem constant byte address 0x4 - core index']
  #allocation1 [shape = 'u32[144,128]{1,0:T(1,128)}', space=vmem, size = 0x12000, scoped, tag = 'internal scratch']
  %s0 = inlined_call_operand.hbm [shape: f32[8,16], index: 0, kind: input, shape index: {}]
  %s1 = inlined_call_operand.hbm [shape: f32[8,13], index: 1, kind: output, shape index: {}]
  %s2 = sld [smem:[#allocation0]]
  $region18: #{tpu_custom_call.1} parent=0
    _
  %s4 = ssub.s32 1, %s2
  %s5 = scalar_select 0, %s4, %s2
  $region1: #{tpu_custom_call.1} parent=0
    #allocation2 [shape = 'u8[4096]{0}', space=vmem, size = 0x1000, scoped, tag = 'input window, operand 0, single buffered']
    #allocation3 [shape = 's32[1]{0}', space=sflag, size = 0x4, scoped, tag = 'scoped memory for tpu_custom_call.1']
    #allocation4 [shape = 's32[1]{0}', space=sflag, size = 0x4, scoped, tag = 'scoped memory for tpu_custom_call.1']
    #allocation5 [shape = 'u8[4096]{0}', space=vmem, size = 0x1000, scoped, tag = 'output window, operand 0, single buffered']
    %6 = vsyncpa [#allocation3], 0
    %7 = vsyncpa [#allocation4], 0
    // Predicated region
    $region2: #{tpu_custom_call.1} parent=1 // pred_check
      _
    $region3: #{tpu_custom_call.1} parent=1 // pred_check_branch
      %9 = sbr.rel (0) target = $region5
    $region4: #{tpu_custom_call.1} parent=1 // pred_region
      %s11 = ssub.s32 128, 128
      %12 = vsyncadd [#allocation3], %s11
      %s14 = sshll.u32 [#allocation2], 4
      %s15 = int_to_ptr.vmem [resolvable:$true] %s14
      %17 = dma.hbm_to_vmem [thread:$0]  %s0, 128, %s15, [#allocation3]
    $region5: #{tpu_custom_call.1} parent=1 // pred_fallthru
      _
    // Predicated region
    $region6: #{tpu_custom_call.1} parent=1 // pred_check
      _
    $region7: #{tpu_custom_call.1} parent=1 // pred_check_branch
      %19 = sbr.rel (0) target = $region9
    $region8: #{tpu_custom_call.1} parent=1 // pred_region
      %20 = dma.done [#allocation3], 128
    $region9: #{tpu_custom_call.1} parent=1 // pred_fallthru
      _
    %v21 = vld [vmem:[#allocation2] sm:$0xff]
    %vm22 = vcmask 105472
    %23 = vst.msk [vmem:[#allocation5] sm:$0xff] %vm22, %v21
    // Predicated region
    $region10: #{tpu_custom_call.1} parent=1 // pred_check
      _
    $region11: #{tpu_custom_call.1} parent=1 // pred_check_branch
      %25 = sbr.rel (0) target = $region13
    $region12: #{tpu_custom_call.1} parent=1 // pred_region
      %s27 = ssub.s32 128, 128
      %28 = vsyncadd [#allocation4], %s27
      %s30 = sshll.u32 [#allocation5], 4
      %s31 = int_to_ptr.vmem [resolvable:$true] %s30
      %33 = dma.vmem_to_hbm [thread:$0]  %s31, 128, %s1, [#allocation4]
    $region13: #{tpu_custom_call.1} parent=1 // pred_fallthru
      _
    // Predicated region
    $region14: #{tpu_custom_call.1} parent=1 // pred_check
      _
    $region15: #{tpu_custom_call.1} parent=1 // pred_check_branch
      %35 = sbr.rel (0) target = $region17
    $region16: #{tpu_custom_call.1} parent=1 // pred_region
      %36 = dma.done [#allocation4], 128
    $region17: #{tpu_custom_call.1} parent=1 // pred_fallthru
      _
    %37 = vsyncpa [#allocation3], 1
    %38 = vsyncpa [#allocation4], 1

</llo_original>
